<compile_context>
chip_gen: v7x
topology: tpu7x:2x2x1
jax: 0.10.0
libtpu: 0.0.40
codegen_flags: <defaults>
</compile_context>

<pallas_src>
import jax
import jax.numpy as jnp
from jax.experimental import pallas as pl
from jax.experimental.pallas import tpu as pltpu

BN_EPS = 1e-5


# ----------------------------------------------------------------------------- kernel
def _linkpred_kernel(x_ref, w0_ref, b0_ref, w1_ref, b1_ref, w2_ref, b2_ref, out_ref):
    # x_ref: [2, C_in, TN]  (pair of node embeddings, transposed, lane-dense)
    x = x_ref[0] * x_ref[1]                                               # [C_in, TN]

    # layer 0: (BN-folded) Linear -> ReLU   (dropout = identity in eval)
    h = jnp.dot(w0_ref[...], x, preferred_element_type=jnp.float32) + b0_ref[...]
    h = jnp.maximum(h, 0.0)                                               # [HID, TN]

    # layer 1: (BN-folded) Linear -> ReLU
    h = jnp.dot(w1_ref[...], h, preferred_element_type=jnp.float32) + b1_ref[...]
    h = jnp.maximum(h, 0.0)                                               # [HID, TN]

    # final Linear
    if out_ref.shape[0] == 1:
        # 1-wide output: VPU broadcast-multiply + sublane reduction (no MXU pass).
        out = jnp.sum(h * w2_ref[...], axis=0, keepdims=True)             # [1, TN]
    else:
        out = jnp.dot(w2_ref[...], h, preferred_element_type=jnp.float32)  # [OUT, TN]
    out_ref[...] = (out + b2_ref[...]).astype(out_ref.dtype)


# ----------------------------------------------------------------------------- wrapper
def _round_up(x, m):
    return ((x + m - 1) // m) * m


def link_predictor(x_i, x_j, folded_params):
    """x_i, x_j: [N, C_in].  folded_params: (w0f, b0f, w1f, b1f, w2f, b2f)."""
    w0f, b0f, w1f, b1f, w2f, b2f = folded_params
    N, in_c = x_i.shape
    out_c = b2f.shape[0]

    # Pack the two embeddings into one ref and move to the lane-dense [C, N] layout.
    x_pair = jnp.stack([x_i.T, x_j.T], axis=0)                 # [2, C_in, N]

    # Tile the batch (lane) axis; pad to a multiple of the tile.
    tile_n = min(1024, _round_up(N, 128))
    n_pad = _round_up(N, tile_n)
    if n_pad != N:
        x_pair = jnp.pad(x_pair, ((0, 0), (0, 0), (0, n_pad - N)))
    grid = (n_pad // tile_n,)

    vmem = pltpu.MemorySpace.VMEM

    def resident(shape):  # weights/biases stay resident across grid steps
        return pl.BlockSpec(shape, lambda i: (0,) * len(shape), memory_space=vmem)

    out = pl.pallas_call(
        _linkpred_kernel,
        out_shape=jax.ShapeDtypeStruct((out_c, n_pad), jnp.float32),
        grid=grid,
        in_specs=[
            pl.BlockSpec((2, in_c, tile_n), lambda i: (0, 0, i), memory_space=vmem),
            resident(w0f.shape), resident(b0f.shape),
            resident(w1f.shape), resident(b1f.shape),
            resident(w2f.shape), resident(b2f.shape),
        ],
        out_specs=pl.BlockSpec((out_c, tile_n), lambda i: (0, i), memory_space=vmem),
        compiler_params=pltpu.CompilerParams(dimension_semantics=("parallel",)),
    )(x_pair, w0f, b0f, w1f, b1f, w2f, b2f)

    return out[:, :N].T                                         # [N, out_c]


# ----------------------------------------------------------------------------- params
def init_params(key, in_channels, hidden_channels, out_channels):
    """Raw params in PyTorch layout: Linear W [C_in, C_out], b [C_out]; BN params [C]."""
    ks = jax.random.split(key, 16)

    def lin(kw, kb, cin, cout):
        bound = 1.0 / jnp.sqrt(cin)
        w = jax.random.uniform(kw, (cin, cout), jnp.float32, -bound, bound)
        b = jax.random.uniform(kb, (cout,), jnp.float32, -bound, bound)
        return w, b

    def bn(kg, kb, km, kv, c):
        gamma = 1.0 + 0.1 * jax.random.normal(kg, (c,), jnp.float32)
        beta = 0.1 * jax.random.normal(kb, (c,), jnp.float32)
        mean = 0.1 * jax.random.normal(km, (c,), jnp.float32)
        var = jnp.abs(1.0 + 0.1 * jax.random.normal(kv, (c,), jnp.float32))
        return gamma, beta, mean, var

    w0, b0 = lin(ks[0], ks[1], in_channels, hidden_channels)
    g0, be0, m0, v0 = bn(ks[2], ks[3], ks[4], ks[5], hidden_channels)
    w1, b1 = lin(ks[6], ks[7], hidden_channels, hidden_channels)
    g1, be1, m1, v1 = bn(ks[8], ks[9], ks[10], ks[11], hidden_channels)
    w2, b2 = lin(ks[12], ks[13], hidden_channels, out_channels)

    return (w0, b0, g0, be0, m0, v0, w1, b1, g1, be1, m1, v1, w2, b2)


def fold_params(raw):
    """Fold BN into the Linear layers and transpose into the kernel's [C_out, C_in] layout."""
    (w0, b0, g0, be0, m0, v0, w1, b1, g1, be1, m1, v1, w2, b2) = raw

    def fold(w, b, g, be, m, v):
        scale = g * jax.lax.rsqrt(v + BN_EPS)                   # [C_out]
        wf = (w * scale[None, :]).T                             # [C_out, C_in]
        bf = ((b - m) * scale + be)[:, None]                    # [C_out, 1]
        return wf, bf

    w0f, b0f = fold(w0, b0, g0, be0, m0, v0)
    w1f, b1f = fold(w1, b1, g1, be1, m1, v1)

    out_c = w2.shape[1]
    w2f = w2 if out_c == 1 else w2.T                            # [HID,1] or [OUT,HID]
    b2f = b2[:, None]                                           # [OUT, 1]
    return (w0f, b0f, w1f, b1f, w2f, b2f)


# ----------------------------------------------------------------------------- reference
def reference(x_i, x_j, raw):
    (w0, b0, g0, be0, m0, v0, w1, b1, g1, be1, m1, v1, w2, b2) = raw
    x = x_i * x_j
    h = x @ w0 + b0
    h = (h - m0) / jnp.sqrt(v0 + BN_EPS) * g0 + be0
    h = jnp.maximum(h, 0.0)
    h = h @ w1 + b1
    h = (h - m1) / jnp.sqrt(v1 + BN_EPS) * g1 + be1
    h = jnp.maximum(h, 0.0)
    return h @ w2 + b2


if __name__ == "__main__":
    # module config: in_channels=16, hidden_channels=32, out_channels=1, num_layers=3,
    # dropout=0.5 (identity in eval), dataset unused in forward.
    N, IN_C, HID_C, OUT_C = 128, 16, 32, 1

    key = jax.random.PRNGKey(0)
    k_xi, k_xj, k_p = jax.random.split(key, 3)
    x_i = jax.random.normal(k_xi, (N, IN_C), jnp.float32)
    x_j = jax.random.normal(k_xj, (N, IN_C), jnp.float32)

    raw_params = init_params(k_p, IN_C, HID_C, OUT_C)
    folded = fold_params(raw_params)

    out = link_predictor(x_i, x_j, folded)
    out = jax.block_until_ready(out)

    ref = reference(x_i, x_j, raw_params)
    assert out.shape == (N, OUT_C)
    assert jnp.allclose(out, ref, atol=1e-4, rtol=1e-4), "mismatch vs JAX reference"

    print("KERNEL_OK")
</pallas_src>

<mosaic_0001>
module attributes {stable_mosaic.version = 11 : i64} {
  func.func @_linkpred_kernel(%arg0: i32, %arg1: memref<2x16x128xf32, #tpu.memory_space<vmem>>, %arg2: memref<32x16xf32, #tpu.memory_space<vmem>>, %arg3: memref<32x1xf32, #tpu.memory_space<vmem>>, %arg4: memref<32x32xf32, #tpu.memory_space<vmem>>, %arg5: memref<32x1xf32, #tpu.memory_space<vmem>>, %arg6: memref<32x1xf32, #tpu.memory_space<vmem>>, %arg7: memref<1x1xf32, #tpu.memory_space<vmem>>, %arg8: memref<1x128xf32, #tpu.memory_space<vmem>>) attributes {dimension_semantics = [#tpu.dimension_semantics<parallel>], iteration_bounds = array<i64: 1>, scalar_prefetch = 0 : i64, scratch_operands = 0 : i64, tpu.core_type = #tpu.core_type<tc>, window_params = [{transform_indices = @transform_0, window_bounds = array<i64: 2, 16, 128>}, {pipeline_mode = #tpu.pipeline_mode<synchronous>, transform_indices = @transform_1, window_bounds = array<i64: 32, 16>}, {pipeline_mode = #tpu.pipeline_mode<synchronous>, transform_indices = @transform_2, window_bounds = array<i64: 32, 1>}, {pipeline_mode = #tpu.pipeline_mode<synchronous>, transform_indices = @transform_3, window_bounds = array<i64: 32, 32>}, {pipeline_mode = #tpu.pipeline_mode<synchronous>, transform_indices = @transform_4, window_bounds = array<i64: 32, 1>}, {pipeline_mode = #tpu.pipeline_mode<synchronous>, transform_indices = @transform_5, window_bounds = array<i64: 32, 1>}, {pipeline_mode = #tpu.pipeline_mode<synchronous>, transform_indices = @transform_6, window_bounds = array<i64: 1, 1>}, {transform_indices = @transform_7, window_bounds = array<i64: 1, 128>}]} {
    %c0 = arith.constant 0 : index
    %c0_0 = arith.constant 0 : index
    %c0_1 = arith.constant 0 : index
    %0 = vector.load %arg1[%c0, %c0_0, %c0_1] : memref<2x16x128xf32, #tpu.memory_space<vmem>>, vector<1x16x128xf32>
    %1 = vector.shape_cast %0 : vector<1x16x128xf32> to vector<16x128xf32>
    %c1 = arith.constant 1 : index
    %c0_2 = arith.constant 0 : index
    %c0_3 = arith.constant 0 : index
    %2 = vector.load %arg1[%c1, %c0_2, %c0_3] : memref<2x16x128xf32, #tpu.memory_space<vmem>>, vector<1x16x128xf32>
    %3 = vector.shape_cast %2 : vector<1x16x128xf32> to vector<16x128xf32>
    %4 = arith.mulf %1, %3 : vector<16x128xf32>
    %c0_4 = arith.constant 0 : index
    %c0_5 = arith.constant 0 : index
    %5 = vector.load %arg2[%c0_4, %c0_5] : memref<32x16xf32, #tpu.memory_space<vmem>>, vector<32x16xf32>
    %cst = arith.constant dense<0.000000e+00> : vector<32x128xf32>
    %6 = tpu.matmul %5, %4, %cst {dimension_numbers = #tpu.dot_dimension_numbers<[1], [0], [0], [1], [0, 0, 1, 1], [], []>} : vector<32x16xf32>, vector<16x128xf32>, vector<32x128xf32> -> vector<32x128xf32>
    %c0_6 = arith.constant 0 : index
    %c0_7 = arith.constant 0 : index
    %7 = vector.load %arg3[%c0_6, %c0_7] : memref<32x1xf32, #tpu.memory_space<vmem>>, vector<32x1xf32>
    %8 = vector.broadcast %7 : vector<32x1xf32> to vector<32x128xf32>
    %9 = arith.addf %6, %8 : vector<32x128xf32>
    %cst_8 = arith.constant 0.000000e+00 : f32
    %10 = vector.broadcast %cst_8 : f32 to vector<32x128xf32>
    %11 = arith.maximumf %9, %10 : vector<32x128xf32>
    %c0_9 = arith.constant 0 : index
    %c0_10 = arith.constant 0 : index
    %12 = vector.load %arg4[%c0_9, %c0_10] : memref<32x32xf32, #tpu.memory_space<vmem>>, vector<32x32xf32>
    %cst_11 = arith.constant dense<0.000000e+00> : vector<32x128xf32>
    %13 = tpu.matmul %12, %11, %cst_11 {dimension_numbers = #tpu.dot_dimension_numbers<[1], [0], [0], [1], [0, 0, 1, 1], [], []>} : vector<32x32xf32>, vector<32x128xf32>, vector<32x128xf32> -> vector<32x128xf32>
    %c0_12 = arith.constant 0 : index
    %c0_13 = arith.constant 0 : index
    %14 = vector.load %arg5[%c0_12, %c0_13] : memref<32x1xf32, #tpu.memory_space<vmem>>, vector<32x1xf32>
    %15 = vector.broadcast %14 : vector<32x1xf32> to vector<32x128xf32>
    %16 = arith.addf %13, %15 : vector<32x128xf32>
    %cst_14 = arith.constant 0.000000e+00 : f32
    %17 = vector.broadcast %cst_14 : f32 to vector<32x128xf32>
    %18 = arith.maximumf %16, %17 : vector<32x128xf32>
    %c0_15 = arith.constant 0 : index
    %c0_16 = arith.constant 0 : index
    %19 = vector.load %arg6[%c0_15, %c0_16] : memref<32x1xf32, #tpu.memory_space<vmem>>, vector<32x1xf32>
    %20 = vector.broadcast %19 : vector<32x1xf32> to vector<32x128xf32>
    %21 = arith.mulf %18, %20 : vector<32x128xf32>
    %cst_17 = arith.constant dense<0.000000e+00> : vector<128xf32>
    %22 = vector.multi_reduction <add>, %21, %cst_17 [0] : vector<32x128xf32> to vector<128xf32>
    %23 = vector.shape_cast %22 : vector<128xf32> to vector<1x128xf32>
    %c0_18 = arith.constant 0 : index
    %c0_19 = arith.constant 0 : index
    %24 = vector.load %arg7[%c0_18, %c0_19] : memref<1x1xf32, #tpu.memory_space<vmem>>, vector<1x1xf32>
    %25 = vector.broadcast %24 : vector<1x1xf32> to vector<1x128xf32>
    %26 = arith.addf %23, %25 : vector<1x128xf32>
    %c0_20 = arith.constant 0 : index
    %c0_21 = arith.constant 0 : index
    %27 = vector.load %arg8[%c0_20, %c0_21] : memref<1x128xf32, #tpu.memory_space<vmem>>, vector<1x128xf32>
    tpu.vector_store %arg8[%c0_20, %c0_21], %26 {strides = array<i32>} : memref<1x128xf32, #tpu.memory_space<vmem>>, vector<1x128xf32>,
    return
  }
  func.func @transform_0(%arg0: i32) -> (i32, i32, i32) {
    %c0_i32 = arith.constant 0 : i32
    %c0_i32_0 = arith.constant 0 : i32
    %c0_i32_1 = arith.constant 0 : i32
    return %c0_i32, %c0_i32_0, %arg0 : i32, i32, i32
  }
  func.func @transform_1(%arg0: i32) -> (i32, i32) {
    %c0_i32 = arith.constant 0 : i32
    %c0_i32_0 = arith.constant 0 : i32
    %c0_i32_1 = arith.constant 0 : i32
    return %c0_i32, %c0_i32_0 : i32, i32
  }
  func.func @transform_2(%arg0: i32) -> (i32, i32) {
    %c0_i32 = arith.constant 0 : i32
    %c0_i32_0 = arith.constant 0 : i32
    %c0_i32_1 = arith.constant 0 : i32
    return %c0_i32, %c0_i32_0 : i32, i32
  }
  func.func @transform_3(%arg0: i32) -> (i32, i32) {
    %c0_i32 = arith.constant 0 : i32
    %c0_i32_0 = arith.constant 0 : i32
    %c0_i32_1 = arith.constant 0 : i32
    return %c0_i32, %c0_i32_0 : i32, i32
  }
  func.func @transform_4(%arg0: i32) -> (i32, i32) {
    %c0_i32 = arith.constant 0 : i32
    %c0_i32_0 = arith.constant 0 : i32
    %c0_i32_1 = arith.constant 0 : i32
    return %c0_i32, %c0_i32_0 : i32, i32
  }
  func.func @transform_5(%arg0: i32) -> (i32, i32) {
    %c0_i32 = arith.constant 0 : i32
    %c0_i32_0 = arith.constant 0 : i32
    %c0_i32_1 = arith.constant 0 : i32
    return %c0_i32, %c0_i32_0 : i32, i32
  }
  func.func @transform_6(%arg0: i32) -> (i32, i32) {
    %c0_i32 = arith.constant 0 : i32
    %c0_i32_0 = arith.constant 0 : i32
    %c0_i32_1 = arith.constant 0 : i32
    return %c0_i32, %c0_i32_0 : i32, i32
  }
  func.func @transform_7(%arg0: i32) -> (i32, i32) {
    %c0_i32 = arith.constant 0 : i32
    %c0_i32_0 = arith.constant 0 : i32
    return %c0_i32, %arg0 : i32, i32
  }
}

</mosaic_0001>

<llo_original>
// kernel: tpu_custom_call.1
$region0: #{tpu_custom_call.1}
  #allocation0 [shape = 'u32[]', space=smem, size = 0x4, offset = 0x4, fixed_abs, tag = 'smem constant byte address 0x4 - core index']
  #allocation1 [shape = 'u32[144,128]{1,0:T(1,128)}', space=vmem, size = 0x12000, scoped, tag = 'internal scratch']
  #allocation2 [shape = 'f32[1,1]{1,0:T(1,128)S(1)}', space=vmem, size = 0x200, scoped, tag = 'scoped memory for tpu_custom_call.1']
  %s0 = inlined_call_operand.vmem [shape: f32[2,16,128], index: 0, kind: input, shape index: {}]
  %s1 = inlined_call_operand.vmem [shape: f32[32,16], index: 1, kind: input, shape index: {}]
  %s2 = inlined_call_operand.vmem [shape: f32[32,1], index: 2, kind: input, shape index: {}]
  %s3 = inlined_call_operand.vmem [shape: f32[32,32], index: 3, kind: input, shape index: {}]
  %s4 = inlined_call_operand.vmem [shape: f32[32,1], index: 4, kind: input, shape index: {}]
  %s5 = inlined_call_operand.vmem [shape: f32[32,1], index: 5, kind: input, shape index: {}]
  %s6 = inlined_call_operand.<no memory space> [shape: f32[1,1], index: 6, kind: input, shape index: {}]
  %s7 = inlined_call_operand.hbm [shape: f32[1,128], index: 7, kind: output, shape index: {}]
  %s8 = sld [smem:[#allocation0]]
  $region38: #{tpu_custom_call.1} parent=0
    _
  %s10 = ssub.s32 1, %s8
  %s11 = scalar_select 0, %s10, %s8
  %v12 = vstv %s6
  %13 = vst [vmem:[#allocation2] sm:$0x1] %v12
  $region1: #{tpu_custom_call.1} parent=0
    #allocation3 [shape = 'u8[512]{0}', space=vmem, size = 0x400, scoped, tag = 'output window, operand 0, single buffered']
    #allocation4 [shape = 's32[1]{0}', space=sflag, size = 0x4, scoped, tag = 'scoped memory for tpu_custom_call.1']
    %14 = vsyncpa [#allocation4], 0
    // Predicated region
    $region2: #{tpu_custom_call.1} parent=1 // pred_check
      _
    $region3: #{tpu_custom_call.1} parent=1 // pred_check_branch
      %16 = sbr.rel (0) target = $region5
    $region4: #{tpu_custom_call.1} parent=1 // pred_region
      _
    $region5: #{tpu_custom_call.1} parent=1 // pred_fallthru
      _
    // Predicated region
    $region6: #{tpu_custom_call.1} parent=1 // pred_check
      _
    $region7: #{tpu_custom_call.1} parent=1 // pred_check_branch
      %18 = sbr.rel (0) target = $region9
    $region8: #{tpu_custom_call.1} parent=1 // pred_region
      _
    $region9: #{tpu_custom_call.1} parent=1 // pred_fallthru
      _
    // Predicated region
    $region10: #{tpu_custom_call.1} parent=1 // pred_check
      _
    $region11: #{tpu_custom_call.1} parent=1 // pred_check_branch
      %20 = sbr.rel (0) target = $region13
    $region12: #{tpu_custom_call.1} parent=1 // pred_region
      _
    $region13: #{tpu_custom_call.1} parent=1 // pred_fallthru
      _
    // Predicated region
    $region14: #{tpu_custom_call.1} parent=1 // pred_check
      _
    $region15: #{tpu_custom_call.1} parent=1 // pred_check_branch
      %22 = sbr.rel (0) target = $region17
    $region16: #{tpu_custom_call.1} parent=1 // pred_region
      _
    $region17: #{tpu_custom_call.1} parent=1 // pred_fallthru
      _
    // Predicated region
    $region18: #{tpu_custom_call.1} parent=1 // pred_check
      _
    $region19: #{tpu_custom_call.1} parent=1 // pred_check_branch
      %24 = sbr.rel (0) target = $region21
    $region20: #{tpu_custom_call.1} parent=1 // pred_region
      _
    $region21: #{tpu_custom_call.1} parent=1 // pred_fallthru
      _
    // Predicated region
    $region22: #{tpu_custom_call.1} parent=1 // pred_check
      _
    $region23: #{tpu_custom_call.1} parent=1 // pred_check_branch
      %26 = sbr.rel (0) target = $region25
    $region24: #{tpu_custom_call.1} parent=1 // pred_region
      _
    $region25: #{tpu_custom_call.1} parent=1 // pred_fallthru
      _
    // Predicated region
    $region26: #{tpu_custom_call.1} parent=1 // pred_check
      _
    $region27: #{tpu_custom_call.1} parent=1 // pred_check_branch
      %28 = sbr.rel (0) target = $region29
    $region28: #{tpu_custom_call.1} parent=1 // pred_region
      _
    $region29: #{tpu_custom_call.1} parent=1 // pred_fallthru
      _
    %v29 = vld [vmem:[%s0] sm:$0xff]
    %v30 = vld [vmem:[%s0 + $0x8] sm:$0xff]
    %s31 = scalar_lea.vmem %s0, 16
    %v32 = vld [vmem:[%s31] sm:$0xff]
    %v33 = vld [vmem:[%s31 + $0x8] sm:$0xff]
    %v34 = vmul.f32 %v29, %v32
    %v35 = vmul.f32 %v30, %v33
    %v36 = vld [vmem:[%s1] sm:$0xff]
    %v37 = vld [vmem:[%s1 + $0x8] sm:$0xff]
    %v38 = vld [vmem:[%s1 + $0x10] sm:$0xff]
    %v39 = vld [vmem:[%s1 + $0x18] sm:$0xff]
    %v40 = vld [vmem:[%s2] sm:$0xff]
    %v41 = vld [vmem:[%s2 + $0x8] sm:$0xff]
    %v42 = vld [vmem:[%s2 + $0x10] sm:$0xff]
    %v43 = vld [vmem:[%s2 + $0x18] sm:$0xff]
    %45 = vset.pattern.permute.xlu0 0
    %46 = vperm.xlu0 %45, %v40
    %v47 = vpop.permute.xlu0 %46
    %50 = vset.pattern.permute.xlu0 0
    %51 = vperm.xlu0 %50, %v41
    %v52 = vpop.permute.xlu0 %51
    %55 = vset.pattern.permute.xlu0 0
    %56 = vperm.xlu0 %55, %v42
    %v57 = vpop.permute.xlu0 %56
    %60 = vset.pattern.permute.xlu0 0
    %61 = vperm.xlu0 %60, %v43
    %v62 = vpop.permute.xlu0 %61
    %vm64 = vcmask 130048
    %v66 = vsel %vm64, %v36, 0
    %v69 = vsel %vm64, %v37, 0
    %v72 = vsel %vm64, %v38, 0
    %v75 = vsel %vm64, %v39, 0
    %77 = vmatprep.subr.mxu0 0.0
    %78 = vmatpush1.msra.mxu0 %v34
    %79 = vmatprep.subr.mxu0 0.0
    %80 = vmatpush1.msra.mxu0 %v35
    %81 = vmatprep.subr.mxu0 0.0
    %82 = vmatpush1.msra.mxu0 0.0
    %83 = vmatprep.subr.mxu0 0.0
    %84 = vmatpush1.msra.mxu0 0.0
    %85 = vmatprep.subr.mxu0 0.0
    %86 = vmatpush1.msra.mxu0 0.0
    %87 = vmatprep.subr.mxu0 0.0
    %88 = vmatpush1.msra.mxu0 0.0
    %89 = vmatprep.subr.mxu0 0.0
    %90 = vmatpush1.msra.mxu0 0.0
    %91 = vmatprep.subr.mxu0 0.0
    %92 = vmatpush1.msra.mxu0 0.0
    %93 = vmatprep.subr.mxu0 0.0
    %94 = vmatpush1.msra.mxu0 0.0
    %95 = vmatprep.subr.mxu0 0.0
    %96 = vmatpush1.msra.mxu0 0.0
    %97 = vmatprep.subr.mxu0 0.0
    %98 = vmatpush1.msra.mxu0 0.0
    %99 = vmatprep.subr.mxu0 0.0
    %100 = vmatpush1.msra.mxu0 0.0
    %101 = vmatprep.subr.mxu0 0.0
    %102 = vmatpush1.msra.mxu0 0.0
    %103 = vmatprep.subr.mxu0 0.0
    %104 = vmatpush1.msra.mxu0 0.0
    %105 = vmatprep.subr.mxu0 0.0
    %106 = vmatpush1.msra.mxu0 0.0
    %107 = vmatprep.subr.mxu0 0.0
    %108 = vmatpush1.msra.mxu0 0.0
    %109 = vmatprep.subr.mxu0 0.0
    %110 = vmatpush1.msra.mxu0 0.0
    %111 = vmatprep.subr.mxu0 0.0
    %112 = vmatpush1.msra.mxu0 0.0
    %113 = vmatprep.subr.mxu0 0.0
    %114 = vmatpush1.msra.mxu0 0.0
    %115 = vmatprep.subr.mxu0 0.0
    %116 = vmatpush1.msra.mxu0 0.0
    %117 = vmatprep.subr.mxu0 0.0
    %118 = vmatpush1.msra.mxu0 0.0
    %119 = vmatprep.subr.mxu0 0.0
    %120 = vmatpush1.msra.mxu0 0.0
    %121 = vmatprep.subr.mxu0 0.0
    %122 = vmatpush1.msra.mxu0 0.0
    %123 = vmatprep.subr.mxu0 0.0
    %124 = vmatpush1.msra.mxu0 0.0
    %125 = vmatprep.subr.mxu0 0.0
    %126 = vmatpush1.msra.mxu0 0.0
    %127 = vmatprep.subr.mxu0 0.0
    %128 = vmatpush1.msra.mxu0 0.0
    %129 = vmatprep.subr.mxu0 0.0
    %130 = vmatpush1.msra.mxu0 0.0
    %131 = vmatprep.subr.mxu0 0.0
    %132 = vmatpush1.msra.mxu0 0.0
    %133 = vmatprep.subr.mxu0 0.0
    %134 = vmatpush1.msra.mxu0 0.0
    %135 = vmatprep.subr.mxu0 0.0
    %136 = vmatpush1.msra.mxu0 0.0
    %137 = vmatprep.subr.mxu0 0.0
    %138 = vmatpush1.msra.mxu0 0.0
    %139 = vmatprep.subr.mxu0 0.0
    %140 = vmatpush1.msra.mxu0 0.0
    %141 = vmatprep.mubr.f32.mxu0 0.0
    %142 = vmatmul.mubr.f32.gmra.mrb[0].mxu0 %v66
    %v143 = vpop.f32.mrb[0].mxu0
    %v144 = vadd.f32 %v47, %v143
    %v145 = vpop.f32.mrb[0].mxu0
    %146 = vmatprep.mubr.f32.mxu0 0.0
    %147 = vmatmul.mubr.f32.gmra.mrb[0].mxu0 %v69
    %v148 = vpop.f32.mrb[0].mxu0
    %v149 = vadd.f32 %v52, %v148
    %v150 = vpop.f32.mrb[0].mxu0
    %151 = vmatprep.mubr.f32.mxu0 0.0
    %152 = vmatmul.mubr.f32.gmra.mrb[0].mxu0 %v72
    %v153 = vpop.f32.mrb[0].mxu0
    %v154 = vadd.f32 %v57, %v153
    %v155 = vpop.f32.mrb[0].mxu0
    %156 = vmatprep.mubr.f32.mxu0 0.0
    %157 = vmatmul.mubr.f32.gmra.mrb[0].mxu0 %v75
    %v158 = vpop.f32.mrb[0].mxu0
    %v159 = vadd.f32 %v62, %v158
    %v160 = vpop.f32.mrb[0].mxu0
    %161 = vdwg.mxu0
    %v162 = vmax.f32 %v144, 0.0
    %v163 = vmax.f32 %v149, 0.0
    %v164 = vmax.f32 %v154, 0.0
    %v165 = vmax.f32 %v159, 0.0
    %v166 = vld [vmem:[%s3] sm:$0xff]
    %v167 = vld [vmem:[%s3 + $0x8] sm:$0xff]
    %v168 = vld [vmem:[%s3 + $0x10] sm:$0xff]
    %v169 = vld [vmem:[%s3 + $0x18] sm:$0xff]
    %v170 = vld [vmem:[%s4] sm:$0xff]
    %v171 = vld [vmem:[%s4 + $0x8] sm:$0xff]
    %v172 = vld [vmem:[%s4 + $0x10] sm:$0xff]
    %v173 = vld [vmem:[%s4 + $0x18] sm:$0xff]
    %175 = vset.pattern.permute.xlu0 0
    %176 = vperm.xlu0 %175, %v170
    %v177 = vpop.permute.xlu0 %176
    %180 = vset.pattern.permute.xlu0 0
    %181 = vperm.xlu0 %180, %v171
    %v182 = vpop.permute.xlu0 %181
    %185 = vset.pattern.permute.xlu0 0
    %186 = vperm.xlu0 %185, %v172
    %v187 = vpop.permute.xlu0 %186
    %190 = vset.pattern.permute.xlu0 0
    %191 = vperm.xlu0 %190, %v173
    %v192 = vpop.permute.xlu0 %191
    %vm194 = vcmask 261120
    %v196 = vsel %vm194, %v166, 0
    %v199 = vsel %vm194, %v167, 0
    %v202 = vsel %vm194, %v168, 0
    %v205 = vsel %vm194, %v169, 0
    %207 = vmatprep.subr.mxu0 0.0
    %208 = vmatpush1.msra.mxu0 %v162
    %209 = vmatprep.subr.mxu0 0.0
    %210 = vmatpush1.msra.mxu0 %v163
    %211 = vmatprep.subr.mxu0 0.0
    %212 = vmatpush1.msra.mxu0 %v164
    %213 = vmatprep.subr.mxu0 0.0
    %214 = vmatpush1.msra.mxu0 %v165
    %215 = vmatprep.subr.mxu0 0.0
    %216 = vmatpush1.msra.mxu0 0.0
    %217 = vmatprep.subr.mxu0 0.0
    %218 = vmatpush1.msra.mxu0 0.0
    %219 = vmatprep.subr.mxu0 0.0
    %220 = vmatpush1.msra.mxu0 0.0
    %221 = vmatprep.subr.mxu0 0.0
    %222 = vmatpush1.msra.mxu0 0.0
    %223 = vmatprep.subr.mxu0 0.0
    %224 = vmatpush1.msra.mxu0 0.0
    %225 = vmatprep.subr.mxu0 0.0
    %226 = vmatpush1.msra.mxu0 0.0
    %227 = vmatprep.subr.mxu0 0.0
    %228 = vmatpush1.msra.mxu0 0.0
    %229 = vmatprep.subr.mxu0 0.0
    %230 = vmatpush1.msra.mxu0 0.0
    %231 = vmatprep.subr.mxu0 0.0
    %232 = vmatpush1.msra.mxu0 0.0
    %233 = vmatprep.subr.mxu0 0.0
    %234 = vmatpush1.msra.mxu0 0.0
    %235 = vmatprep.subr.mxu0 0.0
    %236 = vmatpush1.msra.mxu0 0.0
    %237 = vmatprep.subr.mxu0 0.0
    %238 = vmatpush1.msra.mxu0 0.0
    %239 = vmatprep.subr.mxu0 0.0
    %240 = vmatpush1.msra.mxu0 0.0
    %241 = vmatprep.subr.mxu0 0.0
    %242 = vmatpush1.msra.mxu0 0.0
    %243 = vmatprep.subr.mxu0 0.0
    %244 = vmatpush1.msra.mxu0 0.0
    %245 = vmatprep.subr.mxu0 0.0
    %246 = vmatpush1.msra.mxu0 0.0
    %247 = vmatprep.subr.mxu0 0.0
    %248 = vmatpush1.msra.mxu0 0.0
    %249 = vmatprep.subr.mxu0 0.0
    %250 = vmatpush1.msra.mxu0 0.0
    %251 = vmatprep.subr.mxu0 0.0
    %252 = vmatpush1.msra.mxu0 0.0
    %253 = vmatprep.subr.mxu0 0.0
    %254 = vmatpush1.msra.mxu0 0.0
    %255 = vmatprep.subr.mxu0 0.0
    %256 = vmatpush1.msra.mxu0 0.0
    %257 = vmatprep.subr.mxu0 0.0
    %258 = vmatpush1.msra.mxu0 0.0
    %259 = vmatprep.subr.mxu0 0.0
    %260 = vmatpush1.msra.mxu0 0.0
    %261 = vmatprep.subr.mxu0 0.0
    %262 = vmatpush1.msra.mxu0 0.0
    %263 = vmatprep.subr.mxu0 0.0
    %264 = vmatpush1.msra.mxu0 0.0
    %265 = vmatprep.subr.mxu0 0.0
    %266 = vmatpush1.msra.mxu0 0.0
    %267 = vmatprep.subr.mxu0 0.0
    %268 = vmatpush1.msra.mxu0 0.0
    %269 = vmatprep.subr.mxu0 0.0
    %270 = vmatpush1.msra.mxu0 0.0
    %271 = vmatprep.mubr.f32.mxu0 0.0
    %272 = vmatmul.mubr.f32.gmra.mrb[0].mxu0 %v196
    %v273 = vpop.f32.mrb[0].mxu0
    %v274 = vadd.f32 %v177, %v273
    %v275 = vpop.f32.mrb[0].mxu0
    %276 = vmatprep.mubr.f32.mxu0 0.0
    %277 = vmatmul.mubr.f32.gmra.mrb[0].mxu0 %v199
    %v278 = vpop.f32.mrb[0].mxu0
    %v279 = vadd.f32 %v182, %v278
    %v280 = vpop.f32.mrb[0].mxu0
    %281 = vmatprep.mubr.f32.mxu0 0.0
    %282 = vmatmul.mubr.f32.gmra.mrb[0].mxu0 %v202
    %v283 = vpop.f32.mrb[0].mxu0
    %v284 = vadd.f32 %v187, %v283
    %v285 = vpop.f32.mrb[0].mxu0
    %286 = vmatprep.mubr.f32.mxu0 0.0
    %287 = vmatmul.mubr.f32.gmra.mrb[0].mxu0 %v205
    %v288 = vpop.f32.mrb[0].mxu0
    %v289 = vadd.f32 %v192, %v288
    %v290 = vpop.f32.mrb[0].mxu0
    %291 = vdwg.mxu0
    %v292 = vmax.f32 %v274, 0.0
    %v293 = vmax.f32 %v279, 0.0
    %v294 = vmax.f32 %v284, 0.0
    %v295 = vmax.f32 %v289, 0.0
    %v296 = vld [vmem:[%s5] sm:$0xff]
    %v297 = vld [vmem:[%s5 + $0x8] sm:$0xff]
    %v298 = vld [vmem:[%s5 + $0x10] sm:$0xff]
    %v299 = vld [vmem:[%s5 + $0x18] sm:$0xff]
    %301 = vset.pattern.permute.xlu0 0
    %302 = vperm.xlu0 %301, %v296
    %v303 = vpop.permute.xlu0 %302
    %306 = vset.pattern.permute.xlu0 0
    %307 = vperm.xlu0 %306, %v297
    %v308 = vpop.permute.xlu0 %307
    %311 = vset.pattern.permute.xlu0 0
    %312 = vperm.xlu0 %311, %v298
    %v313 = vpop.permute.xlu0 %312
    %316 = vset.pattern.permute.xlu0 0
    %317 = vperm.xlu0 %316, %v299
    %v318 = vpop.permute.xlu0 %317
    %v320 = vmul.f32 %v292, %v303
    %v321 = vmul.f32 %v293, %v308
    %v322 = vmul.f32 %v294, %v313
    %v323 = vmul.f32 %v295, %v318
    %v324 = vadd.f32 %v320, %v321
    %v325 = vadd.f32 %v324, %v322
    %v326 = vadd.f32 %v325, %v323
    %v327 = vrot.slane %v326, 4
    %v328 = vadd.f32 %v326, %v327
    %v329 = vrot.slane %v328, 2
    %v330 = vadd.f32 %v328, %v329
    %v331 = vrot.slane %v330, 1
    %v332 = vadd.f32 %v330, %v331
    %v333 = vld [vmem:[#allocation2] sm:$0x1]
    %335 = vset.pattern.permute.xlu0 0
    %336 = vperm.xlu0 %335, %v333
    %v337 = vpop.permute.xlu0 %336
    %v339 = vlaneseq
    %v340 = vshrl.u32 %v339, 7
    %v341 = vsub.s32 0, %v340
    %v342 = vrot.slane %v337, %v341
    %v343 = vadd.f32 %v332, %v342
    %344 = vst [vmem:[#allocation3] sm:$0x1] %v343
    // Predicated region
    $region30: #{tpu_custom_call.1} parent=1 // pred_check
      _
    $region31: #{tpu_custom_call.1} parent=1 // pred_check_branch
      %346 = sbr.rel (0) target = $region33
    $region32: #{tpu_custom_call.1} parent=1 // pred_region
      %s348 = ssub.s32 16, 16
      %349 = vsyncadd [#allocation4], %s348
      %s351 = sshll.u32 [#allocation3], 4
      %s352 = int_to_ptr.vmem [resolvable:$true] %s351
      %354 = dma.vmem_to_hbm [thread:$0]  %s352, 16, %s7, [#allocation4]
    $region33: #{tpu_custom_call.1} parent=1 // pred_fallthru
      _
    // Predicated region
    $region34: #{tpu_custom_call.1} parent=1 // pred_check
      _
    $region35: #{tpu_custom_call.1} parent=1 // pred_check_branch
      %356 = sbr.rel (0) target = $region37
    $region36: #{tpu_custom_call.1} parent=1 // pred_region
      %357 = dma.done [#allocation4], 16
    $region37: #{tpu_custom_call.1} parent=1 // pred_fallthru
      _
    %358 = vsyncpa [#allocation4], 1

</llo_original>
